<compile_context>
chip_gen: v7x
topology: tpu7x:2x2x1
jax: 0.10.0
libtpu: 0.0.40
codegen_flags: <defaults>
</compile_context>

<pallas_src>
import functools

import jax
import jax.numpy as jnp
from jax import lax
from jax.experimental import pallas as pl
from jax.experimental.pallas import tpu as pltpu

ENCODER_RNN_SIZE = 128      # per-frame feature size (encoder_rnn_size)
ENCODER_HIDDEN_SIZE = 64    # GRU hidden size per direction (encoder_hidden_size)
DELIMIT_LENGTH = 8          # frame window; stride = DELIMIT_LENGTH // 2

# Explicit scoped-VMEM ceiling (v7x default is 32 MiB of 64 MiB physical).
_VMEM_LIMIT_BYTES = 64 * 1024 * 1024


def _round_up(x, m):
    return (x + m - 1) // m * m


# --------------------------- feature-stage kernel ---------------------------

def _feature_kernel(x_ref, w_ref, b_ref, o_ref):
    # x_ref: [TILE_N, H*W*C] bf16 frames (channels-last, spatial-flattened).
    # The spatial average pool is folded into the weight (w_pool = tile(W,HW)/HW),
    # so this is a single dense MXU matmul with K = H*W*C.
    o_ref[...] = (jnp.dot(x_ref[...], w_ref[...],
                          preferred_element_type=jnp.float32)
                  + b_ref[...]).astype(o_ref.dtype)


def cnn_features(frames_flat, w_pool_bf16, b_feat):
    # frames_flat: [N, H*W*C] bf16 -> [N_pad, E] bf16
    n, k = frames_flat.shape
    e = w_pool_bf16.shape[1]
    tile_n = 512 if n >= 512 else _round_up(n, 8)
    n_pad = _round_up(n, tile_n)
    if n_pad != n:
        frames_flat = jnp.pad(frames_flat, ((0, n_pad - n), (0, 0)))
    return pl.pallas_call(
        _feature_kernel,
        out_shape=jax.ShapeDtypeStruct((n_pad, e), jnp.bfloat16),
        grid=(n_pad // tile_n,),
        in_specs=[
            pl.BlockSpec((tile_n, k), lambda i: (i, 0)),
            pl.BlockSpec((k, e), lambda i: (0, 0)),
            pl.BlockSpec((1, e), lambda i: (0, 0)),
        ],
        out_specs=pl.BlockSpec((tile_n, e), lambda i: (i, 0)),
        compiler_params=pltpu.CompilerParams(
            dimension_semantics=("parallel",),
            vmem_limit_bytes=_VMEM_LIMIT_BYTES),
    )(frames_flat, w_pool_bf16, b_feat)


# ---------------------- fused window-pool + BiGRU kernel ---------------------

def _encoder_kernel(feats_ref, mask_ref,
                    w1if_ref, w1ib_ref, b1i_ref, w1h_ref, b1h_ref,
                    w2if_ref, w2ib_ref, b2i_ref, w2h_ref, b2h_ref,
                    y2_ref, h1_ref, h2_ref, v_ref,
                    xp_ref, gif_ref, gib_ref, y1_ref,
                    *, t_w, bt, hh, stride, delimit):
    dh = 2 * hh        # lane-packed hidden width (fwd | bwd) = 128 here
    g = 3 * dh         # fused gate width (r | z | n)

    # (a) overlapping 8-frame / stride-4 window mean: block-row sums over the
    #     time-major bf16 feats block (no pool_mat, no zero-multiply matmul).
    def pool_step(w, carry):
        base = w * (stride * bt)
        acc = feats_ref[pl.ds(pl.multiple_of(base, bt), bt), :].astype(jnp.float32)
        for d in range(1, delimit):
            acc = acc + feats_ref[
                pl.ds(pl.multiple_of(base + d * bt, bt), bt), :].astype(jnp.float32)
        xp_ref[pl.ds(pl.multiple_of(w * bt, bt), bt), :] = acc * (1.0 / delimit)
        return carry

    lax.fori_loop(0, t_w, pool_step, 0, unroll=min(t_w, 4))

    def project(x_bf16, wf_ref, wb_ref, bi_ref):
        # Hoisted GRU input projections for ALL time steps at once.
        gif_ref[...] = (jnp.dot(x_bf16, wf_ref[...],
                                preferred_element_type=jnp.float32) + bi_ref[...])
        gib_ref[...] = jnp.dot(x_bf16, wb_ref[...],
                               preferred_element_type=jnp.float32)

    def gru_scan(wh_ref, bh_ref, y_out_ref):
        wh = wh_ref[...]                                         # [dh, g] bf16
        bh = pl.broadcast_to(bh_ref[...], (bt, g))               # hoisted broadcast

        def step(t, carry):
            h, acc = carry
            rf = pl.multiple_of(t * bt, bt)                      # fwd-time rows
            rb = pl.multiple_of((t_w - 1 - t) * bt, bt)          # bwd-time rows
            gi = gif_ref[pl.ds(rf, bt), :] + gib_ref[pl.ds(rb, bt), :]
            gh = jnp.dot(h.astype(jnp.bfloat16), wh,
                         preferred_element_type=jnp.float32) + bh
            r = jax.nn.sigmoid(gi[:, 0:dh] + gh[:, 0:dh])
            z = jax.nn.sigmoid(gi[:, dh:2 * dh] + gh[:, dh:2 * dh])
            n = jnp.tanh(gi[:, 2 * dh:3 * dh] + r * gh[:, 2 * dh:3 * dh])
            h_new = (1.0 - z) * n + z * h
            # pack_padded_sequence emulation: padded steps freeze h, emit zeros.
            # mask lanes 0:hh carry valid[t]; lanes hh:dh carry valid[Tw-1-t].
            m = mask_ref[pl.ds(rf, bt), :]
            y_new = m * h_new
            # ONE unmasked 128-lane store per step (scan-time-major layout);
            # the bwd half is un-reversed once outside / via weight packing.
            y_out_ref[pl.ds(rf, bt), :] = y_new
            return (y_new + (1.0 - m) * h, acc + y_new)

        h0 = jnp.zeros((bt, dh), jnp.float32)
        return lax.fori_loop(0, t_w, step, (h0, h0), unroll=min(t_w, 8))

    # (b) layer 1: hoisted input projection + packed fwd/bwd recurrence.
    project(xp_ref[...].astype(jnp.bfloat16), w1if_ref, w1ib_ref, b1i_ref)
    h1, _ = gru_scan(w1h_ref, b1h_ref, y1_ref)
    h1_ref[...] = h1

    # (c) layer 2: consumes layer-1's scan-time-major output; its input
    #     weights were half-swapped on the host so gi(t)=gif'[t]+gib'[Tw-1-t]
    #     reproduces the true-time-ordered gates exactly.
    project(y1_ref[...].astype(jnp.bfloat16), w2if_ref, w2ib_ref, b2i_ref)
    h2, v_acc = gru_scan(w2h_ref, b2h_ref, y2_ref)
    h2_ref[...] = h2

    # (d) v_local = mean over time of encoder_output (denominator = full Tw,
    #     matching torch.mean on the zero-padded output); accumulated in-scan.
    v_ref[...] = v_acc * (1.0 / t_w)


def encoder_fused(feats_tiled, mask_tiled, gru_layers, *,
                  t_w, t_frames, bt, hh, stride, delimit):
    n_bt, _, e = feats_tiled.shape
    dh = 2 * hh
    g = 3 * dh
    l1, l2 = gru_layers
    kern = functools.partial(_encoder_kernel, t_w=t_w, bt=bt, hh=hh,
                             stride=stride, delimit=delimit)
    return pl.pallas_call(
        kern,
        out_shape=(jax.ShapeDtypeStruct((n_bt, t_w * bt, dh), jnp.float32),  # y2 (scan-major)
                   jax.ShapeDtypeStruct((n_bt, bt, dh), jnp.float32),        # layer-1 final h
                   jax.ShapeDtypeStruct((n_bt, bt, dh), jnp.float32),        # layer-2 final h
                   jax.ShapeDtypeStruct((n_bt, bt, dh), jnp.float32)),       # v_local (padded)
        grid=(n_bt,),
        in_specs=[
            pl.BlockSpec((None, t_frames * bt, e), lambda i: (i, 0, 0)),
            pl.BlockSpec((None, t_w * bt, dh), lambda i: (i, 0, 0)),
            pl.BlockSpec((e, g), lambda i: (0, 0)),
            pl.BlockSpec((e, g), lambda i: (0, 0)),
            pl.BlockSpec((1, g), lambda i: (0, 0)),
            pl.BlockSpec((dh, g), lambda i: (0, 0)),
            pl.BlockSpec((1, g), lambda i: (0, 0)),
            pl.BlockSpec((dh, g), lambda i: (0, 0)),
            pl.BlockSpec((dh, g), lambda i: (0, 0)),
            pl.BlockSpec((1, g), lambda i: (0, 0)),
            pl.BlockSpec((dh, g), lambda i: (0, 0)),
            pl.BlockSpec((1, g), lambda i: (0, 0)),
        ],
        out_specs=(
            pl.BlockSpec((None, t_w * bt, dh), lambda i: (i, 0, 0)),
            pl.BlockSpec((None, bt, dh), lambda i: (i, 0, 0)),
            pl.BlockSpec((None, bt, dh), lambda i: (i, 0, 0)),
            pl.BlockSpec((None, bt, dh), lambda i: (i, 0, 0)),
        ),
        scratch_shapes=[pltpu.VMEM((t_w * bt, e), jnp.float32),    # pooled features
                        pltpu.VMEM((t_w * bt, g), jnp.float32),    # gi (fwd slots)
                        pltpu.VMEM((t_w * bt, g), jnp.float32),    # gi (bwd slots)
                        pltpu.VMEM((t_w * bt, dh), jnp.float32)],  # layer-1 outputs
        compiler_params=pltpu.CompilerParams(
            dimension_semantics=("parallel",),
            vmem_limit_bytes=_VMEM_LIMIT_BYTES),
    )(feats_tiled, mask_tiled,
      l1["wif"], l1["wib"], l1["bi"], l1["wh"], l1["bh"],
      l2["wif"], l2["wib"], l2["bi"], l2["wh"], l2["bh"])


# ----------------------------- parameter packing ----------------------------

def _uniform(key, shape, scale):
    return jax.random.uniform(key, shape, jnp.float32, -scale, scale)


def init_gru_direction(key, input_size, hidden_size):
    ks = jax.random.split(key, 12)
    s = 1.0 / (hidden_size ** 0.5)
    names = ["wir", "wiz", "win", "whr", "whz", "whn",
             "bir", "biz", "bin", "bhr", "bhz", "bhn"]
    shapes = ([(input_size, hidden_size)] * 3 + [(hidden_size, hidden_size)] * 3
              + [(1, hidden_size)] * 6)
    return {n: _uniform(k, sh, s) for n, sh, k in zip(names, shapes, ks)}


def _place_gates(wr, wz, wn, hh, is_bwd):
    # Packed gate layout (lanes): [ r_f | r_b | z_f | z_b | n_f | n_b ], each hh wide.
    dh = 2 * hh
    rows = wr.shape[0]
    out = jnp.zeros((rows, 3 * dh), jnp.float32)
    o = hh if is_bwd else 0
    out = out.at[:, o:o + hh].set(wr)
    out = out.at[:, dh + o:dh + o + hh].set(wz)
    out = out.at[:, 2 * dh + o:2 * dh + o + hh].set(wn)
    return out


def pack_bidir_layer(p_fwd, p_bwd, hh, swap_input_halves=False):
    dh = 2 * hh
    wif = _place_gates(p_fwd["wir"], p_fwd["wiz"], p_fwd["win"], hh, False)
    wib = _place_gates(p_bwd["wir"], p_bwd["wiz"], p_bwd["win"], hh, True)
    if swap_input_halves:
        # Layer-2 consumes layer-1's scan-time-major packed output
        # y1_scan[t] = [fwd(t) | bwd(Tw-1-t)].  Swapping the bottom (bwd-input)
        # row halves of wif/wib makes gi(t) = gif'[t] + gib'[Tw-1-t] reproduce
        # the exact true-time-ordered gates (pure host-side packing change).
        wif_new = jnp.concatenate([wif[:hh], wib[hh:]], axis=0)
        wib_new = jnp.concatenate([wib[:hh], wif[hh:]], axis=0)
        wif, wib = wif_new, wib_new
    bi = (_place_gates(p_fwd["bir"], p_fwd["biz"], p_fwd["bin"], hh, False)
          + _place_gates(p_bwd["bir"], p_bwd["biz"], p_bwd["bin"], hh, True))
    wh = jnp.zeros((dh, 3 * dh), jnp.float32)
    wh = wh.at[:hh, :].set(
        _place_gates(p_fwd["whr"], p_fwd["whz"], p_fwd["whn"], hh, False))
    wh = wh.at[hh:, :].set(
        _place_gates(p_bwd["whr"], p_bwd["whz"], p_bwd["whn"], hh, True))
    bh = (_place_gates(p_fwd["bhr"], p_fwd["bhz"], p_fwd["bhn"], hh, False)
          + _place_gates(p_bwd["bhr"], p_bwd["bhz"], p_bwd["bhn"], hh, True))
    return {
        "wif": wif.astype(jnp.bfloat16),   # MXU inputs in bf16, f32 accumulation
        "wib": wib.astype(jnp.bfloat16),
        "bi": bi,                          # [1, 3*dh] f32
        "wh": wh.astype(jnp.bfloat16),
        "bh": bh,                          # [1, 3*dh] f32 (elementwise stays f32)
    }


def init_params(key, channels):
    k_fw, k_fb, k_l0, k_l1 = jax.random.split(key, 4)
    hh = ENCODER_HIDDEN_SIZE
    in_sizes = [ENCODER_RNN_SIZE, 2 * hh]
    gru = []
    for layer, klayer in enumerate((k_l0, k_l1)):
        kf, kb = jax.random.split(klayer)
        p_f = init_gru_direction(kf, in_sizes[layer], hh)
        p_b = init_gru_direction(kb, in_sizes[layer], hh)
        gru.append(pack_bidir_layer(p_f, p_b, hh, swap_input_halves=(layer == 1)))
    return {
        "w_feat": _uniform(k_fw, (channels, ENCODER_RNN_SIZE), 0.1),   # f32 master copy
        "b_feat": _uniform(k_fb, (1, ENCODER_RNN_SIZE), 0.1),
        "gru": gru,
    }


# ------------------------------ forward glue --------------------------------

def encoder_forward(video, video_lengths, params, max_video_length):
    """Mirrors Seq2SeqClassifier.encoder_features + v_local computation.

    video:            [B, T, C, H, W] float32
    video_lengths:    [B] int32 (multiples of 4, >= 8)
    max_video_length: STATIC python int == max(video_lengths)
    returns: encoder_output [B, Tw, 2*Hh], frame_lengths [B],
             v_local [B, 1, 2*Hh], encoder_hidden [4, B, Hh]
    """
    b, t, c, hi, wi = video.shape
    hh = ENCODER_HIDDEN_SIZE
    dh = 2 * hh
    e = ENCODER_RNN_SIZE
    stride = DELIMIT_LENGTH // 2
    t_w = max_video_length // stride - 1             # static number of windows
    assert t_w >= 1 and max_video_length <= t

    # Batch tiling: keep all rows in one recurrence block up to 64 (the per-step
    # matmul is latency-bound, extra rows are ~free); larger batches split into
    # 64-row tiles on a "parallel" grid axis so v7x's two TCs both get work.
    if b <= 64:
        bt = _round_up(b, 8)
        b_pad = bt
    else:
        bt = 64
        b_pad = _round_up(b, 64)
    n_bt = b_pad // bt

    hw = hi * wi
    # 1) feature stage: fold the adaptive-avg-pool into the matmul (K = H*W*C),
    #    bf16 frames in, bf16 feats out (f32 accumulation on the MXU).
    frames = video.transpose(0, 1, 3, 4, 2).reshape(b * t, hw * c).astype(jnp.bfloat16)
    w_pool = (jnp.tile(params["w_feat"], (hw, 1)) * (1.0 / hw)).astype(jnp.bfloat16)
    feats = cnn_features(frames, w_pool, params["b_feat"])               # [N_pad, E] bf16

    # 2) time-major, batch-tiled layout for the fused encoder kernel.
    feats = feats[:b * t].reshape(b, t, e)
    feats = jnp.pad(feats, ((0, b_pad - b), (0, 0), (0, 0)))
    feats_tiled = (feats.reshape(n_bt, bt, t, e)
                        .transpose(0, 2, 1, 3)
                        .reshape(n_bt, t * bt, e))                       # row = tau*bt + b

    frame_lengths = video_lengths // stride - 1                          # [B]
    w_idx = jnp.arange(t_w)
    valid = (w_idx[:, None] < frame_lengths[None, :]).astype(jnp.float32)  # [Tw, B]
    valid = jnp.pad(valid, ((0, 0), (0, b_pad - b)))
    mask = jnp.concatenate(
        [jnp.broadcast_to(valid[:, :, None], (t_w, b_pad, hh)),          # fwd mask @ t
         jnp.broadcast_to(valid[::-1, :, None], (t_w, b_pad, hh))],      # bwd mask @ Tw-1-t
        axis=-1)
    mask_tiled = (mask.reshape(t_w, n_bt, bt, dh)
                      .transpose(1, 0, 2, 3)
                      .reshape(n_bt, t_w * bt, dh))

    # 3) fused: window pooling + 2-layer bidirectional GRU + v_local, one call.
    y2, h1, h2, v_pad = encoder_fused(feats_tiled, mask_tiled, params["gru"],
                                      t_w=t_w, t_frames=t, bt=bt, hh=hh,
                                      stride=stride, delimit=DELIMIT_LENGTH)

    # un-tile and un-reverse the bwd half (scan-time-major -> true time order).
    y2 = (y2.reshape(n_bt, t_w, bt, dh).transpose(1, 0, 2, 3)
            .reshape(t_w, b_pad, dh))
    enc = jnp.concatenate([y2[:, :, :hh], y2[::-1, :, hh:]], axis=-1)    # [Tw, B_pad, dh]
    encoder_output = enc[:, :b].transpose(1, 0, 2)                       # [B, Tw, 2*Hh]
    h1 = h1.reshape(b_pad, dh)[:b]
    h2 = h2.reshape(b_pad, dh)[:b]
    v_local = v_pad.reshape(b_pad, dh)[:b, None, :]                      # [B, 1, 2*Hh]
    encoder_hidden = jnp.stack(
        [h1[:, :hh], h1[:, hh:], h2[:, :hh], h2[:, hh:]], axis=0)        # [4, B, Hh]
    return encoder_output, frame_lengths, v_local, encoder_hidden


if __name__ == "__main__":
    B, T, C, HI, WI = 2, 16, 8, 8, 8
    key = jax.random.PRNGKey(0)
    k_video, k_params = jax.random.split(key)

    video = jax.random.normal(k_video, (B, T, C, HI, WI), jnp.float32)
    video_lengths = jnp.array([16, 12], dtype=jnp.int32)
    params = init_params(k_params, C)

    enc_out, frame_lens, v_local, enc_hidden = encoder_forward(
        video, video_lengths, params, max_video_length=16)
    jax.block_until_ready((enc_out, frame_lens, v_local, enc_hidden))

    assert enc_out.shape == (B, 3, 2 * ENCODER_HIDDEN_SIZE)
    assert v_local.shape == (B, 1, 2 * ENCODER_HIDDEN_SIZE)
    assert enc_hidden.shape == (4, B, ENCODER_HIDDEN_SIZE)
    assert bool(jnp.all(jnp.isfinite(enc_out)))
    assert bool(jnp.all(jnp.isfinite(v_local)))
    print("KERNEL_OK")
</pallas_src>

<mosaic_0001>
module attributes {stable_mosaic.version = 11 : i64} {
  func.func @_feature_kernel(%arg0: i32, %arg1: memref<32x512xbf16, #tpu.memory_space<vmem>>, %arg2: memref<512x128xbf16, #tpu.memory_space<vmem>>, %arg3: memref<1x128xf32, #tpu.memory_space<vmem>>, %arg4: memref<32x128xbf16, #tpu.memory_space<vmem>>) attributes {dimension_semantics = [#tpu.dimension_semantics<parallel>], iteration_bounds = array<i64: 1>, scalar_prefetch = 0 : i64, scratch_operands = 0 : i64, tpu.core_type = #tpu.core_type<tc>, window_params = [{transform_indices = @transform_0, window_bounds = array<i64: 32, 512>}, {pipeline_mode = #tpu.pipeline_mode<synchronous>, transform_indices = @transform_1, window_bounds = array<i64: 512, 128>}, {pipeline_mode = #tpu.pipeline_mode<synchronous>, transform_indices = @transform_2, window_bounds = array<i64: 1, 128>}, {transform_indices = @transform_3, window_bounds = array<i64: 32, 128>}]} {
    %c0 = arith.constant 0 : index
    %c0_0 = arith.constant 0 : index
    %0 = vector.load %arg1[%c0, %c0_0] : memref<32x512xbf16, #tpu.memory_space<vmem>>, vector<32x512xbf16>
    %c0_1 = arith.constant 0 : index
    %c0_2 = arith.constant 0 : index
    %1 = vector.load %arg2[%c0_1, %c0_2] : memref<512x128xbf16, #tpu.memory_space<vmem>>, vector<512x128xbf16>
    %cst = arith.constant dense<0.000000e+00> : vector<32x128xf32>
    %2 = tpu.matmul %0, %1, %cst {dimension_numbers = #tpu.dot_dimension_numbers<[1], [0], [0], [1], [0, 0, 1, 1], [], []>} : vector<32x512xbf16>, vector<512x128xbf16>, vector<32x128xf32> -> vector<32x128xf32>
    %c0_3 = arith.constant 0 : index
    %c0_4 = arith.constant 0 : index
    %3 = vector.load %arg3[%c0_3, %c0_4] : memref<1x128xf32, #tpu.memory_space<vmem>>, vector<1x128xf32>
    %4 = vector.broadcast %3 : vector<1x128xf32> to vector<32x128xf32>
    %5 = arith.addf %2, %4 : vector<32x128xf32>
    %6 = arith.truncf %5 : vector<32x128xf32> to vector<32x128xbf16>
    %c0_5 = arith.constant 0 : index
    %c0_6 = arith.constant 0 : index
    %7 = vector.load %arg4[%c0_5, %c0_6] : memref<32x128xbf16, #tpu.memory_space<vmem>>, vector<32x128xbf16>
    tpu.vector_store %arg4[%c0_5, %c0_6], %6 {strides = array<i32>} : memref<32x128xbf16, #tpu.memory_space<vmem>>, vector<32x128xbf16>,
    return
  }
  func.func @transform_0(%arg0: i32) -> (i32, i32) {
    %c0_i32 = arith.constant 0 : i32
    %c0_i32_0 = arith.constant 0 : i32
    return %arg0, %c0_i32 : i32, i32
  }
  func.func @transform_1(%arg0: i32) -> (i32, i32) {
    %c0_i32 = arith.constant 0 : i32
    %c0_i32_0 = arith.constant 0 : i32
    %c0_i32_1 = arith.constant 0 : i32
    return %c0_i32, %c0_i32_0 : i32, i32
  }
  func.func @transform_2(%arg0: i32) -> (i32, i32) {
    %c0_i32 = arith.constant 0 : i32
    %c0_i32_0 = arith.constant 0 : i32
    %c0_i32_1 = arith.constant 0 : i32
    return %c0_i32, %c0_i32_0 : i32, i32
  }
  func.func @transform_3(%arg0: i32) -> (i32, i32) {
    %c0_i32 = arith.constant 0 : i32
    %c0_i32_0 = arith.constant 0 : i32
    return %arg0, %c0_i32 : i32, i32
  }
}

</mosaic_0001>

<llo_original>
// kernel: tpu_custom_call.1
$region0: #{tpu_custom_call.1}
  #allocation0 [shape = 'u32[]', space=smem, size = 0x4, offset = 0x4, fixed_abs, tag = 'smem constant byte address 0x4 - core index']
  #allocation1 [shape = 'u32[144,128]{1,0:T(1,128)}', space=vmem, size = 0x12000, scoped, tag = 'internal scratch']
  %s0 = inlined_call_operand.hbm [shape: bf16[32,512], index: 0, kind: input, shape index: {}]
  %s1 = inlined_call_operand.hbm [shape: bf16[512,128], index: 1, kind: input, shape index: {}]
  %s2 = inlined_call_operand.hbm [shape: f32[1,128], index: 2, kind: input, shape index: {}]
  %s3 = inlined_call_operand.hbm [shape: bf16[32,128], index: 3, kind: output, shape index: {}]
  %s4 = sld [smem:[#allocation0]]
  $region34: #{tpu_custom_call.1} parent=0
    _
  %s6 = ssub.s32 1, %s4
  %s7 = scalar_select 0, %s6, %s4
  $region1: #{tpu_custom_call.1} parent=0
    #allocation2 [shape = 'u8[32768]{0}', space=vmem, size = 0x8000, scoped, tag = 'input window, operand 0, single buffered']
    #allocation3 [shape = 's32[1]{0}', space=sflag, size = 0x4, scoped, tag = 'scoped memory for tpu_custom_call.1']
    #allocation4 [shape = 's32[1]{0}', space=sflag, size = 0x4, scoped, tag = 'scoped memory for tpu_custom_call.1']
    #allocation5 [shape = 'u8[131072]{0}', space=vmem, size = 0x20000, scoped, tag = 'input window, operand 1, single buffered']
    #allocation6 [shape = 's32[1]{0}', space=sflag, size = 0x4, scoped, tag = 'scoped memory for tpu_custom_call.1']
    #allocation7 [shape = 'u8[512]{0}', space=vmem, size = 0x400, scoped, tag = 'input window, operand 2, single buffered']
    #allocation8 [shape = 'u8[8192]{0}', space=vmem, size = 0x2000, scoped, tag = 'output window, operand 0, single buffered']
    %8 = vsyncpa [#allocation3], 0
    %9 = vsyncpa [#allocation6], 0
    %10 = vsyncpa [#allocation4], 0
    // Predicated region
    $region2: #{tpu_custom_call.1} parent=1 // pred_check
      _
    $region3: #{tpu_custom_call.1} parent=1 // pred_check_branch
      %12 = sbr.rel (0) target = $region5
    $region4: #{tpu_custom_call.1} parent=1 // pred_region
      %s14 = ssub.s32 1024, 1024
      %15 = vsyncadd [#allocation3], %s14
      %s16 = sshll.u32 [#allocation2], 4
      %s17 = int_to_ptr.vmem [resolvable:$true] %s16
      %22 = dma.hbm_to_vmem [thread:$0]  %s0, 1024, %s17, [#allocation3], 256, 256, 16
    $region5: #{tpu_custom_call.1} parent=1 // pred_fallthru
      _
    // Predicated region
    $region6: #{tpu_custom_call.1} parent=1 // pred_check
      _
    $region7: #{tpu_custom_call.1} parent=1 // pred_check_branch
      %24 = sbr.rel (0) target = $region9
    $region8: #{tpu_custom_call.1} parent=1 // pred_region
      %s26 = ssub.s32 4096, 4096
      %27 = vsyncadd [#allocation6], %s26
      %s28 = sshll.u32 [#allocation5], 4
      %s29 = int_to_ptr.vmem [resolvable:$true] %s28
      %34 = dma.hbm_to_vmem [thread:$0]  %s1, 4096, %s29, [#allocation6], 64, 64, 4
    $region9: #{tpu_custom_call.1} parent=1 // pred_fallthru
      _
    // Predicated region
    $region10: #{tpu_custom_call.1} parent=1 // pred_check
      _
    $region11: #{tpu_custom_call.1} parent=1 // pred_check_branch
      %36 = sbr.rel (0) target = $region13
    $region12: #{tpu_custom_call.1} parent=1 // pred_region
      %s38 = ssub.s32 16, 16
      %39 = vsyncadd [#allocation6], %s38
      %s41 = sshll.u32 [#allocation7], 4
      %s42 = int_to_ptr.vmem [resolvable:$true] %s41
      %44 = dma.hbm_to_vmem [thread:$0]  %s2, 16, %s42, [#allocation6]
    $region13: #{tpu_custom_call.1} parent=1 // pred_fallthru
      _
    // Predicated region
    $region14: #{tpu_custom_call.1} parent=1 // pred_check
      _
    $region15: #{tpu_custom_call.1} parent=1 // pred_check_branch
      %46 = sbr.rel (0) target = $region17
    $region16: #{tpu_custom_call.1} parent=1 // pred_region
      %47 = dma.done [#allocation3], 1024
    $region17: #{tpu_custom_call.1} parent=1 // pred_fallthru
      _
    // Predicated region
    $region18: #{tpu_custom_call.1} parent=1 // pred_check
      _
    $region19: #{tpu_custom_call.1} parent=1 // pred_check_branch
      %49 = sbr.rel (0) target = $region21
    $region20: #{tpu_custom_call.1} parent=1 // pred_region
      %50 = dma.done [#allocation6], 4096
    $region21: #{tpu_custom_call.1} parent=1 // pred_fallthru
      _
    // Predicated region
    $region22: #{tpu_custom_call.1} parent=1 // pred_check
      _
    $region23: #{tpu_custom_call.1} parent=1 // pred_check_branch
      %52 = sbr.rel (0) target = $region25
    $region24: #{tpu_custom_call.1} parent=1 // pred_region
      %53 = dma.done [#allocation6], 16
    $region25: #{tpu_custom_call.1} parent=1 // pred_fallthru
      _
    %v55 = vld [vmem:[#allocation2] sm:$0xff]
    %v56 = vld [vmem:[#allocation2 + $0x8] sm:$0xff]
    %v57 = vld [vmem:[#allocation2 + $0x10] sm:$0xff]
    %v58 = vld [vmem:[#allocation2 + $0x18] sm:$0xff]
    %v59 = vld [vmem:[#allocation2 + $0x20] sm:$0xff]
    %v60 = vld [vmem:[#allocation2 + $0x28] sm:$0xff]
    %v61 = vld [vmem:[#allocation2 + $0x30] sm:$0xff]
    %v62 = vld [vmem:[#allocation2 + $0x38] sm:$0xff]
    %v63 = vld [vmem:[#allocation5] sm:$0xf]
    %v64 = vld [vmem:[#allocation5 + $0x4] sm:$0xf]
    %v65 = vld [vmem:[#allocation5 + $0x8] sm:$0xf]
    %v66 = vld [vmem:[#allocation5 + $0xc] sm:$0xf]
    %v67 = vld [vmem:[#allocation5 + $0x10] sm:$0xf]
    %v68 = vld [vmem:[#allocation5 + $0x14] sm:$0xf]
    %v69 = vld [vmem:[#allocation5 + $0x18] sm:$0xf]
    %v70 = vld [vmem:[#allocation5 + $0x1c] sm:$0xf]
    %v71 = vld [vmem:[#allocation5 + $0x20] sm:$0xf]
    %v72 = vld [vmem:[#allocation5 + $0x24] sm:$0xf]
    %v73 = vld [vmem:[#allocation5 + $0x28] sm:$0xf]
    %v74 = vld [vmem:[#allocation5 + $0x2c] sm:$0xf]
    %v75 = vld [vmem:[#allocation5 + $0x30] sm:$0xf]
    %v76 = vld [vmem:[#allocation5 + $0x34] sm:$0xf]
    %v77 = vld [vmem:[#allocation5 + $0x38] sm:$0xf]
    %v78 = vld [vmem:[#allocation5 + $0x3c] sm:$0xf]
    %v79 = vld [vmem:[#allocation5 + $0x40] sm:$0xf]
    %v80 = vld [vmem:[#allocation5 + $0x44] sm:$0xf]
    %v81 = vld [vmem:[#allocation5 + $0x48] sm:$0xf]
    %v82 = vld [vmem:[#allocation5 + $0x4c] sm:$0xf]
    %v83 = vld [vmem:[#allocation5 + $0x50] sm:$0xf]
    %v84 = vld [vmem:[#allocation5 + $0x54] sm:$0xf]
    %v85 = vld [vmem:[#allocation5 + $0x58] sm:$0xf]
    %v86 = vld [vmem:[#allocation5 + $0x5c] sm:$0xf]
    %v87 = vld [vmem:[#allocation5 + $0x60] sm:$0xf]
    %v88 = vld [vmem:[#allocation5 + $0x64] sm:$0xf]
    %v89 = vld [vmem:[#allocation5 + $0x68] sm:$0xf]
    %v90 = vld [vmem:[#allocation5 + $0x6c] sm:$0xf]
    %v91 = vld [vmem:[#allocation5 + $0x70] sm:$0xf]
    %v92 = vld [vmem:[#allocation5 + $0x74] sm:$0xf]
    %v93 = vld [vmem:[#allocation5 + $0x78] sm:$0xf]
    %v94 = vld [vmem:[#allocation5 + $0x7c] sm:$0xf]
    %v95 = vld [vmem:[#allocation5 + $0x80] sm:$0xf]
    %v96 = vld [vmem:[#allocation5 + $0x84] sm:$0xf]
    %v97 = vld [vmem:[#allocation5 + $0x88] sm:$0xf]
    %v98 = vld [vmem:[#allocation5 + $0x8c] sm:$0xf]
    %v99 = vld [vmem:[#allocation5 + $0x90] sm:$0xf]
    %v100 = vld [vmem:[#allocation5 + $0x94] sm:$0xf]
    %v101 = vld [vmem:[#allocation5 + $0x98] sm:$0xf]
    %v102 = vld [vmem:[#allocation5 + $0x9c] sm:$0xf]
    %v103 = vld [vmem:[#allocation5 + $0xa0] sm:$0xf]
    %v104 = vld [vmem:[#allocation5 + $0xa4] sm:$0xf]
    %v105 = vld [vmem:[#allocation5 + $0xa8] sm:$0xf]
    %v106 = vld [vmem:[#allocation5 + $0xac] sm:$0xf]
    %v107 = vld [vmem:[#allocation5 + $0xb0] sm:$0xf]
    %v108 = vld [vmem:[#allocation5 + $0xb4] sm:$0xf]
    %v109 = vld [vmem:[#allocation5 + $0xb8] sm:$0xf]
    %v110 = vld [vmem:[#allocation5 + $0xbc] sm:$0xf]
    %v111 = vld [vmem:[#allocation5 + $0xc0] sm:$0xf]
    %v112 = vld [vmem:[#allocation5 + $0xc4] sm:$0xf]
    %v113 = vld [vmem:[#allocation5 + $0xc8] sm:$0xf]
    %v114 = vld [vmem:[#allocation5 + $0xcc] sm:$0xf]
    %v115 = vld [vmem:[#allocation5 + $0xd0] sm:$0xf]
    %v116 = vld [vmem:[#allocation5 + $0xd4] sm:$0xf]
    %v117 = vld [vmem:[#allocation5 + $0xd8] sm:$0xf]
    %v118 = vld [vmem:[#allocation5 + $0xdc] sm:$0xf]
    %v119 = vld [vmem:[#allocation5 + $0xe0] sm:$0xf]
    %v120 = vld [vmem:[#allocation5 + $0xe4] sm:$0xf]
    %v121 = vld [vmem:[#allocation5 + $0xe8] sm:$0xf]
    %v122 = vld [vmem:[#allocation5 + $0xec] sm:$0xf]
    %v123 = vld [vmem:[#allocation5 + $0xf0] sm:$0xf]
    %v124 = vld [vmem:[#allocation5 + $0xf4] sm:$0xf]
    %v125 = vld [vmem:[#allocation5 + $0xf8] sm:$0xf]
    %v126 = vld [vmem:[#allocation5 + $0xfc] sm:$0xf]
    %v127 = vld [vmem:[#allocation7] sm:$0x1]
    %v129 = vlaneseq
    %v130 = vshrl.u32 %v129, 7
    %v131 = vsub.s32 0, %v130
    %v132 = vrot.slane %v127, %v131
    %v142 = vunpack.c.l.b16 %v55
    %v143 = vunpack.c.h.b16 %v55
    %v144 = vunpack.c.l.b16 %v56
    %v145 = vunpack.c.h.b16 %v56
    %v146 = vunpack.c.l.b16 %v57
    %v147 = vunpack.c.h.b16 %v57
    %v148 = vunpack.c.l.b16 %v58
    %v149 = vunpack.c.h.b16 %v58
    %v150 = vunpack.c.l.b16 %v59
    %v151 = vunpack.c.h.b16 %v59
    %v152 = vunpack.c.l.b16 %v60
    %v153 = vunpack.c.h.b16 %v60
    %v154 = vunpack.c.l.b16 %v61
    %v155 = vunpack.c.h.b16 %v61
    %v156 = vunpack.c.l.b16 %v62
    %v157 = vunpack.c.h.b16 %v62
    %v158 = vpack.c.b16 %v146, %v142
    %v159 = vpack.c.b16 %v147, %v143
    %v160 = vpack.c.b16 %v148, %v144
    %v161 = vpack.c.b16 %v149, %v145
    %v162 = vpack.c.b16 %v154, %v150
    %v163 = vpack.c.b16 %v155, %v151
    %v164 = vpack.c.b16 %v156, %v152
    %v165 = vpack.c.b16 %v157, %v153
    %v238 = vunpack.c.l.b16 %v63
    %v239 = vunpack.c.l.b16 %v64
    %v240 = vunpack.c.l.b16 %v65
    %v241 = vunpack.c.l.b16 %v66
    %v242 = vunpack.c.l.b16 %v67
    %v243 = vunpack.c.l.b16 %v68
    %v244 = vunpack.c.l.b16 %v69
    %v245 = vunpack.c.l.b16 %v70
    %v246 = vunpack.c.l.b16 %v71
    %v247 = vunpack.c.l.b16 %v72
    %v248 = vunpack.c.l.b16 %v73
    %v249 = vunpack.c.l.b16 %v74
    %v250 = vunpack.c.l.b16 %v75
    %v251 = vunpack.c.l.b16 %v76
    %v252 = vunpack.c.l.b16 %v77
    %v253 = vunpack.c.l.b16 %v78
    %v254 = vunpack.c.l.b16 %v79
    %v255 = vunpack.c.l.b16 %v80
    %v256 = vunpack.c.l.b16 %v81
    %v257 = vunpack.c.l.b16 %v82
    %v258 = vunpack.c.l.b16 %v83
    %v259 = vunpack.c.l.b16 %v84
    %v260 = vunpack.c.l.b16 %v85
    %v261 = vunpack.c.l.b16 %v86
    %v262 = vunpack.c.l.b16 %v87
    %v263 = vunpack.c.l.b16 %v88
    %v264 = vunpack.c.l.b16 %v89
    %v265 = vunpack.c.l.b16 %v90
    %v266 = vunpack.c.l.b16 %v91
    %v267 = vunpack.c.l.b16 %v92
    %v268 = vunpack.c.l.b16 %v93
    %v269 = vunpack.c.l.b16 %v94
    %v270 = vunpack.c.l.b16 %v95
    %v271 = vunpack.c.l.b16 %v96
    %v272 = vunpack.c.l.b16 %v97
    %v273 = vunpack.c.l.b16 %v98
    %v274 = vunpack.c.l.b16 %v99
    %v275 = vunpack.c.l.b16 %v100
    %v276 = vunpack.c.l.b16 %v101
    %v277 = vunpack.c.l.b16 %v102
    %v278 = vunpack.c.l.b16 %v103
    %v279 = vunpack.c.l.b16 %v104
    %v280 = vunpack.c.l.b16 %v105
    %v281 = vunpack.c.l.b16 %v106
    %v282 = vunpack.c.l.b16 %v107
    %v283 = vunpack.c.l.b16 %v108
    %v284 = vunpack.c.l.b16 %v109
    %v285 = vunpack.c.l.b16 %v110
    %v286 = vunpack.c.l.b16 %v111
    %v287 = vunpack.c.l.b16 %v112
    %v288 = vunpack.c.l.b16 %v113
    %v289 = vunpack.c.l.b16 %v114
    %v290 = vunpack.c.l.b16 %v115
    %v291 = vunpack.c.l.b16 %v116
    %v292 = vunpack.c.l.b16 %v117
    %v293 = vunpack.c.l.b16 %v118
    %v294 = vunpack.c.l.b16 %v119
    %v295 = vunpack.c.l.b16 %v120
    %v296 = vunpack.c.l.b16 %v121
    %v297 = vunpack.c.l.b16 %v122
    %v298 = vunpack.c.l.b16 %v123
    %v299 = vunpack.c.l.b16 %v124
    %v300 = vunpack.c.l.b16 %v125
    %v301 = vunpack.c.l.b16 %v126
    %v302 = vpack.c.b16 %v239, %v238
    %v303 = vpack.c.b16 %v241, %v240
    %v304 = vpack.c.b16 %v243, %v242
    %v305 = vpack.c.b16 %v245, %v244
    %v306 = vpack.c.b16 %v247, %v246
    %v307 = vpack.c.b16 %v249, %v248
    %v308 = vpack.c.b16 %v251, %v250
    %v309 = vpack.c.b16 %v253, %v252
    %v310 = vpack.c.b16 %v255, %v254
    %v311 = vpack.c.b16 %v257, %v256
    %v312 = vpack.c.b16 %v259, %v258
    %v313 = vpack.c.b16 %v261, %v260
    %v314 = vpack.c.b16 %v263, %v262
    %v315 = vpack.c.b16 %v265, %v264
    %v316 = vpack.c.b16 %v267, %v266
    %v317 = vpack.c.b16 %v269, %v268
    %v318 = vpack.c.b16 %v271, %v270
    %v319 = vpack.c.b16 %v273, %v272
    %v320 = vpack.c.b16 %v275, %v274
    %v321 = vpack.c.b16 %v277, %v276
    %v322 = vpack.c.b16 %v279, %v278
    %v323 = vpack.c.b16 %v281, %v280
    %v324 = vpack.c.b16 %v283, %v282
    %v325 = vpack.c.b16 %v285, %v284
    %v326 = vpack.c.b16 %v287, %v286
    %v327 = vpack.c.b16 %v289, %v288
    %v328 = vpack.c.b16 %v291, %v290
    %v329 = vpack.c.b16 %v293, %v292
    %v330 = vpack.c.b16 %v295, %v294
    %v331 = vpack.c.b16 %v297, %v296
    %v332 = vpack.c.b16 %v299, %v298
    %v333 = vpack.c.b16 %v301, %v300
    %366 = vmatprep.subr.bf16.mxu0 0
    %367 = vmatpush1.bf16.msra.mxu0 %v302
    %368 = vmatprep.subr.bf16.mxu0 0
    %369 = vmatpush1.bf16.msra.mxu0 %v303
    %370 = vmatprep.subr.bf16.mxu0 0
    %371 = vmatpush1.bf16.msra.mxu0 %v304
    %372 = vmatprep.subr.bf16.mxu0 0
    %373 = vmatpush1.bf16.msra.mxu0 %v305
    %374 = vmatprep.subr.bf16.mxu0 0
    %375 = vmatpush1.bf16.msra.mxu0 %v306
    %376 = vmatprep.subr.bf16.mxu0 0
    %377 = vmatpush1.bf16.msra.mxu0 %v307
    %378 = vmatprep.subr.bf16.mxu0 0
    %379 = vmatpush1.bf16.msra.mxu0 %v308
    %380 = vmatprep.subr.bf16.mxu0 0
    %381 = vmatpush1.bf16.msra.mxu0 %v309
    %382 = vmatprep.subr.bf16.mxu0 0
    %383 = vmatpush1.bf16.msra.mxu0 %v310
    %384 = vmatprep.subr.bf16.mxu0 0
    %385 = vmatpush1.bf16.msra.mxu0 %v311
    %386 = vmatprep.subr.bf16.mxu0 0
    %387 = vmatpush1.bf16.msra.mxu0 %v312
    %388 = vmatprep.subr.bf16.mxu0 0
    %389 = vmatpush1.bf16.msra.mxu0 %v313
    %390 = vmatprep.subr.bf16.mxu0 0
    %391 = vmatpush1.bf16.msra.mxu0 %v314
    %392 = vmatprep.subr.bf16.mxu0 0
    %393 = vmatpush1.bf16.msra.mxu0 %v315
    %394 = vmatprep.subr.bf16.mxu0 0
    %395 = vmatpush1.bf16.msra.mxu0 %v316
    %396 = vmatprep.subr.bf16.mxu0 0
    %397 = vmatpush1.bf16.msra.mxu0 %v317
    %398 = vmatprep.mubr.bf16.mxu0 %v159
    %399 = vmatmul.mubr.bf16.gmra.mrb[0].mxu0 %v158
    %v400 = vpop.f32.mrb[0].mxu0
    %v401 = vadd.f32 %v132, %v400
    %v402 = vpop.f32.mrb[0].mxu0
    %v403 = vpop.f32.mrb[0].mxu0
    %v404 = vadd.f32 %v132, %v403
    %v405 = vpop.f32.mrb[0].mxu0
    %406 = vmatprep.mubr.bf16.mxu0 %v163
    %407 = vmatmul.mubr.bf16.gmra.mrb[0].mxu0 %v162
    %v408 = vpop.f32.mrb[0].mxu0
    %v409 = vadd.f32 %v132, %v408
    %v410 = vpop.f32.mrb[0].mxu0
    %v411 = vpop.f32.mrb[0].mxu0
    %v412 = vadd.f32 %v132, %v411
    %v413 = vpop.f32.mrb[0].mxu0
    %414 = vdwg.mxu0
    %415 = vmatprep.subr.bf16.mxu0 0
    %416 = vmatpush1.bf16.msra.mxu0 %v318
    %417 = vmatprep.subr.bf16.mxu0 0
    %418 = vmatpush1.bf16.msra.mxu0 %v319
    %419 = vmatprep.subr.bf16.mxu0 0
    %420 = vmatpush1.bf16.msra.mxu0 %v320
    %421 = vmatprep.subr.bf16.mxu0 0
    %422 = vmatpush1.bf16.msra.mxu0 %v321
    %423 = vmatprep.subr.bf16.mxu0 0
    %424 = vmatpush1.bf16.msra.mxu0 %v322
    %425 = vmatprep.subr.bf16.mxu0 0
    %426 = vmatpush1.bf16.msra.mxu0 %v323
    %427 = vmatprep.subr.bf16.mxu0 0
    %428 = vmatpush1.bf16.msra.mxu0 %v324
    %429 = vmatprep.subr.bf16.mxu0 0
    %430 = vmatpush1.bf16.msra.mxu0 %v325
    %431 = vmatprep.subr.bf16.mxu0 0
    %432 = vmatpush1.bf16.msra.mxu0 %v326
    %433 = vmatprep.subr.bf16.mxu0 0
    %434 = vmatpush1.bf16.msra.mxu0 %v327
    %435 = vmatprep.subr.bf16.mxu0 0
    %436 = vmatpush1.bf16.msra.mxu0 %v328
    %437 = vmatprep.subr.bf16.mxu0 0
    %438 = vmatpush1.bf16.msra.mxu0 %v329
    %439 = vmatprep.subr.bf16.mxu0 0
    %440 = vmatpush1.bf16.msra.mxu0 %v330
    %441 = vmatprep.subr.bf16.mxu0 0
    %442 = vmatpush1.bf16.msra.mxu0 %v331
    %443 = vmatprep.subr.bf16.mxu0 0
    %444 = vmatpush1.bf16.msra.mxu0 %v332
    %445 = vmatprep.subr.bf16.mxu0 0
    %446 = vmatpush1.bf16.msra.mxu0 %v333
    %447 = vmatprep.mubr.bf16.mxu0 %v161
    %448 = vmatmul.mubr.bf16.gmra.mrb[0].mxu0 %v160
    %v449 = vpop.f32.mrb[0].mxu0
    %v450 = vadd.f32 %v401, %v449
    %v451 = vpop.f32.mrb[0].mxu0
    %v452 = vpop.f32.mrb[0].mxu0
    %v453 = vadd.f32 %v404, %v452
    %v454 = vpop.f32.mrb[0].mxu0
    %455 = vmatprep.mubr.bf16.mxu0 %v165
    %456 = vmatmul.mubr.bf16.gmra.mrb[0].mxu0 %v164
    %v457 = vpop.f32.mrb[0].mxu0
    %v458 = vadd.f32 %v409, %v457
    %v459 = vpop.f32.mrb[0].mxu0
    %v460 = vpop.f32.mrb[0].mxu0
    %v461 = vadd.f32 %v412, %v460
    %v462 = vpop.f32.mrb[0].mxu0
    %463 = vdwg.mxu0
    %v464 = vpack.c.bf16 %v453, %v450
    %v465 = vpack.c.bf16 %v461, %v458
    %v468 = vunpack.c.l.b16 %v464
    %v469 = vunpack.c.h.b16 %v464
    %v470 = vunpack.c.l.b16 %v465
    %v471 = vunpack.c.h.b16 %v465
    %v472 = vpack.c.b16 %v468, %v468
    %v473 = vpack.c.b16 %v469, %v469
    %v474 = vpack.c.b16 %v470, %v470
    %v475 = vpack.c.b16 %v471, %v471
    %480 = vst [vmem:[#allocation8] sm:$0xf] %v472
    %481 = vst [vmem:[#allocation8 + $0x4] sm:$0xf] %v473
    %482 = vst [vmem:[#allocation8 + $0x8] sm:$0xf] %v474
    %483 = vst [vmem:[#allocation8 + $0xc] sm:$0xf] %v475
    // Predicated region
    $region26: #{tpu_custom_call.1} parent=1 // pred_check
      _
    $region27: #{tpu_custom_call.1} parent=1 // pred_check_branch
      %485 = sbr.rel (0) target = $region29
    $region28: #{tpu_custom_call.1} parent=1 // pred_region
      %s487 = ssub.s32 256, 256
      %488 = vsyncadd [#allocation4], %s487
      %s489 = sshll.u32 [#allocation8], 4
      %s490 = int_to_ptr.vmem [resolvable:$true] %s489
      %495 = dma.vmem_to_hbm [thread:$0]  %s490, 256, %s3, [#allocation4], 64, 64, 4
    $region29: #{tpu_custom_call.1} parent=1 // pred_fallthru
      _
    // Predicated region
    $region30: #{tpu_custom_call.1} parent=1 // pred_check
      _
    $region31: #{tpu_custom_call.1} parent=1 // pred_check_branch
      %497 = sbr.rel (0) target = $region33
    $region32: #{tpu_custom_call.1} parent=1 // pred_region
      %498 = dma.done [#allocation4], 256
    $region33: #{tpu_custom_call.1} parent=1 // pred_fallthru
      _
    %499 = vsyncpa [#allocation3], 1
    %500 = vsyncpa [#allocation6], 1
    %501 = vsyncpa [#allocation4], 1

</llo_original>
